<compile_context>
chip_gen: v7x
topology: tpu7x:2x2x1
jax: 0.10.0
libtpu: 0.0.40
codegen_flags: <defaults>
</compile_context>

<pallas_src>
import jax
import jax.numpy as jnp
from jax import lax
from jax.experimental import pallas as pl
from jax.experimental.pallas import tpu as pltpu


# ----------------------------------------------------------------------------
# Kernel
# ----------------------------------------------------------------------------
def _make_kernel(K, H, W, Cin, Cout, padding, imgs_per_step):
    WCin = W * Cin
    WCout = W * Cout
    B = imgs_per_step

    def kernel(x_ref, wb_ref, shift_ref, o_ref, lhs_ref):
        # x_ref:     (B*H, W*Cin)       bf16  packed rows of B images
        # wb_ref:    (K*W*Cin, W*Cout)  bf16  banded weights (BN scale folded)
        # shift_ref: (1, W*Cout)        f32   folded conv-bias + BN shift
        # o_ref:     (B*H, W*Cout)      bf16  lane-dense output rows
        # lhs_ref:   (B*H, K*W*Cin)     bf16  VMEM scratch: per-step im2row LHS
        #
        # LHS assembly (once per step):
        #   lhs[b*H + h, kh*WCin + j] = x[b, h + kh - padding, j]  (0 if row OOB)
        # Only the halo rows per (image, band) get explicit zeros -- no full
        # memset (review item 1).  Written every step on purpose: under
        # "parallel" sharding each core has its own scratch.
        for b in range(B):
            r0 = b * H
            for kh in range(K):
                c0 = kh * WCin
                s = kh - padding                       # static row shift of this band
                if s < 0:
                    lhs_ref[pl.ds(r0, -s), pl.ds(c0, WCin)] = jnp.zeros(
                        (-s, WCin), lhs_ref.dtype)
                    lhs_ref[pl.ds(r0 - s, H + s), pl.ds(c0, WCin)] = (
                        x_ref[pl.ds(r0, H + s), :])
                elif s == 0:
                    lhs_ref[pl.ds(r0, H), pl.ds(c0, WCin)] = x_ref[pl.ds(r0, H), :]
                else:
                    lhs_ref[pl.ds(r0, H - s), pl.ds(c0, WCin)] = (
                        x_ref[pl.ds(r0 + s, H - s), :])
                    lhs_ref[pl.ds(r0 + H - s, s), pl.ds(c0, WCin)] = jnp.zeros(
                        (s, WCin), lhs_ref.dtype)

        # Single deep matmul per step: (B*H, K*W*Cin) @ (K*W*Cin, W*Cout),
        # bf16 operands, f32 accumulation (review items 2/3/5).  The result
        # tile is tiny here (a few vregs); for larger M tiles it should stream
        # through a pltpu.VMEM accumulator instead (review item 11).
        acc = jnp.dot(lhs_ref[...], wb_ref[...],
                      preferred_element_type=jnp.float32)   # (B*H, W*Cout) f32
        y = jnp.maximum(acc + shift_ref[...], 0.0)           # + shift, ReLU
        o_ref[...] = y.astype(o_ref.dtype)                   # bf16 writeback

    return kernel


# ----------------------------------------------------------------------------
# Wrapper
# ----------------------------------------------------------------------------
def _pick_imgs_per_step(N, H, max_rows=256):
    """Largest divisor B of N with B*H <= max_rows (raise M toward the MXU width)."""
    best = 1
    for b in range(1, N + 1):
        if N % b == 0 and b * H <= max_rows:
            best = b
    return best


def fold_basic_conv2d_params(params, W, *, kernel_size=3, padding=1, eps=1e-5):
    """Fold conv bias + eval-mode BN; build the banded weight matrix (done once per layer).

    wb[kh*W*Cin + (w+kw-p)*Cin + ci, w*Cout + co] = (bn_scale * conv_w)[co, ci, kh, kw]
    (out-of-range rows dropped == zero padding in the W direction).
    """
    conv_w, conv_b, bn_g, bn_b, bn_m, bn_v = params
    Cout, Cin, K, _ = conv_w.shape
    assert K == kernel_size
    scale = bn_g / jnp.sqrt(bn_v + eps)                       # (Cout,)
    shift = (conv_b - bn_m) * scale + bn_b                    # (Cout,)
    w_fold = conv_w * scale[:, None, None, None]              # BN scale into weights

    wt = jnp.transpose(w_fold, (2, 3, 1, 0))                  # (K, K, Cin, Cout)
    bands = []
    for kh in range(K):
        bk = jnp.zeros((W * Cin, W * Cout), jnp.float32)
        for kw in range(K):
            sel = jnp.eye(W, k=padding - kw, dtype=jnp.float32)   # W-shift matrix
            bk = bk + jnp.kron(sel, wt[kh, kw])
        bands.append(bk)
    wb = jnp.concatenate(bands, axis=0).astype(jnp.bfloat16)      # (K*W*Cin, W*Cout)
    shift_packed = jnp.tile(shift, W)[None, :].astype(jnp.float32)  # (1, W*Cout)
    return wb, shift_packed


def basic_conv2d_packed(x2d, wb, shift_packed, *, N, H, W, Cin, Cout,
                        kernel_size=3, padding=1):
    """Packed-layout forward: x2d (N*H, W*Cin) bf16 -> (N*H, W*Cout) bf16."""
    K = kernel_size
    WCin, WCout = W * Cin, W * Cout
    B = _pick_imgs_per_step(N, H)          # images stacked per grid step (M = B*H)
    M = B * H
    kernel = _make_kernel(K, H, W, Cin, Cout, padding, B)

    def call(const_pipeline_mode):
        const_kw = ({} if const_pipeline_mode is None
                    else dict(pipeline_mode=const_pipeline_mode))
        return pl.pallas_call(
            kernel,
            out_shape=jax.ShapeDtypeStruct((N * H, WCout), jnp.bfloat16),
            grid_spec=pltpu.PrefetchScalarGridSpec(
                num_scalar_prefetch=0,
                grid=(N // B,),
                in_specs=[
                    pl.BlockSpec((M, WCin), lambda g: (g, 0)),
                    pl.BlockSpec((K * WCin, WCout), lambda g: (0, 0), **const_kw),
                    pl.BlockSpec((1, WCout), lambda g: (0, 0), **const_kw),
                ],
                out_specs=pl.BlockSpec((M, WCout), lambda g: (g, 0)),
                scratch_shapes=[pltpu.VMEM((M, K * WCin), jnp.bfloat16)],
            ),
            compiler_params=pltpu.CompilerParams(
                dimension_semantics=("parallel",)),
        )(x2d, wb, shift_packed)

    try:
        # Grid-invariant operands never change block -> single-buffer them
        # (halves their resident VMEM at real sizes, review item 4).
        return call(pl.Buffered(1))
    except Exception:
        # Fallback for Pallas builds that reject single-buffer pipeline_mode.
        return call(None)


def basic_conv2d(x_nchw, params, *, kernel_size=3, padding=1, eps=1e-5):
    """NCHW adapter (returns bf16 NCHW).  In a real model the surrounding layers
    should stay in the packed (rows, W*C) layout so both transposes disappear."""
    N, Cin, H, W = x_nchw.shape
    Cout = params[0].shape[0]
    wb, shift_packed = fold_basic_conv2d_params(
        params, W, kernel_size=kernel_size, padding=padding, eps=eps)
    x2d = (jnp.transpose(x_nchw, (0, 2, 3, 1))
           .reshape(N * H, W * Cin)
           .astype(jnp.bfloat16))                      # bf16 input (review item 5)
    out2d = basic_conv2d_packed(x2d, wb, shift_packed, N=N, H=H, W=W,
                                Cin=Cin, Cout=Cout,
                                kernel_size=kernel_size, padding=padding)
    out = out2d.reshape(N, H, W, Cout)
    return jnp.transpose(out, (0, 3, 1, 2))


# ----------------------------------------------------------------------------
# Reference + self-test
# ----------------------------------------------------------------------------
def reference(x_nchw, params, *, kernel_size=3, padding=1, eps=1e-5):
    """Plain-JAX f32 reference matching the PyTorch module in eval mode."""
    conv_w, conv_b, bn_g, bn_b, bn_m, bn_v = params
    y = lax.conv_general_dilated(
        x_nchw, conv_w, window_strides=(1, 1),
        padding=[(padding, padding), (padding, padding)],
        dimension_numbers=("NCHW", "OIHW", "NCHW")) + conv_b[None, :, None, None]
    y = (y - bn_m[None, :, None, None]) / jnp.sqrt(bn_v + eps)[None, :, None, None]
    y = y * bn_g[None, :, None, None] + bn_b[None, :, None, None]
    return jnp.maximum(y, 0.0)


if __name__ == "__main__":
    # Small shapes consistent with the module (W*Cout = 128 -> lane-dense output).
    N, Cin, Cout, H, W, K = 2, 4, 8, 16, 16, 3

    key = jax.random.PRNGKey(0)
    ks = jax.random.split(key, 7)

    conv_w = 0.2 * jax.random.normal(ks[0], (Cout, Cin, K, K), jnp.float32)
    conv_b = 0.1 * jax.random.normal(ks[1], (Cout,), jnp.float32)
    bn_g = 1.0 + 0.1 * jax.random.normal(ks[2], (Cout,), jnp.float32)
    bn_b = 0.1 * jax.random.normal(ks[3], (Cout,), jnp.float32)
    bn_m = 0.05 * jax.random.normal(ks[4], (Cout,), jnp.float32)
    bn_v = jnp.abs(1.0 + 0.1 * jax.random.normal(ks[5], (Cout,), jnp.float32))

    params = (conv_w, conv_b, bn_g, bn_b, bn_m, bn_v)
    x = jax.random.normal(ks[6], (N, Cin, H, W), jnp.float32)

    out = basic_conv2d(x, params, kernel_size=K, padding=1)
    out = jax.block_until_ready(out)

    ref = jax.block_until_ready(reference(x, params, kernel_size=K, padding=1))
    assert out.shape == (N, Cout, H, W)
    out_f32 = out.astype(jnp.float32)
    # bf16 MXU operands + bf16 writeback (f32 accumulate): tolerance widened vs f32.
    assert jnp.allclose(out_f32, ref, atol=5e-2, rtol=5e-2), (
        f"max abs err = {jnp.max(jnp.abs(out_f32 - ref))}")

    print("KERNEL_OK")
</pallas_src>

<mosaic_0001>
module attributes {stable_mosaic.version = 11 : i64} {
  func.func @kernel(%arg0: i32, %arg1: memref<32x64xbf16, #tpu.memory_space<vmem>>, %arg2: memref<192x128xbf16, #tpu.memory_space<vmem>>, %arg3: memref<1x128xf32, #tpu.memory_space<vmem>>, %arg4: memref<32x128xbf16, #tpu.memory_space<vmem>>, %arg5: memref<32x192xbf16, #tpu.memory_space<vmem>>) attributes {dimension_semantics = [#tpu.dimension_semantics<parallel>], iteration_bounds = array<i64: 1>, scalar_prefetch = 0 : i64, scratch_operands = 1 : i64, tpu.core_type = #tpu.core_type<tc>, window_params = [{transform_indices = @transform_0, window_bounds = array<i64: 32, 64>}, {pipeline_mode = #tpu.pipeline_mode<synchronous>, transform_indices = @transform_1, window_bounds = array<i64: 192, 128>}, {pipeline_mode = #tpu.pipeline_mode<synchronous>, transform_indices = @transform_2, window_bounds = array<i64: 1, 128>}, {transform_indices = @transform_3, window_bounds = array<i64: 32, 128>}]} {
    %cst = arith.constant 0.000000e+00 : bf16
    %0 = vector.broadcast %cst : bf16 to vector<1x64xbf16>
    %c0 = arith.constant 0 : index
    %c0_0 = arith.constant 0 : index
    %1 = vector.load %arg5[%c0, %c0_0] : memref<32x192xbf16, #tpu.memory_space<vmem>>, vector<1x64xbf16>
    tpu.vector_store %arg5[%c0, %c0_0], %0 {strides = array<i32>} : memref<32x192xbf16, #tpu.memory_space<vmem>>, vector<1x64xbf16>,
    %c0_1 = arith.constant 0 : index
    %c0_2 = arith.constant 0 : index
    %2 = vector.load %arg1[%c0_1, %c0_2] : memref<32x64xbf16, #tpu.memory_space<vmem>>, vector<15x64xbf16>
    %c1 = arith.constant 1 : index
    %c0_3 = arith.constant 0 : index
    %3 = vector.load %arg5[%c1, %c0_3] : memref<32x192xbf16, #tpu.memory_space<vmem>>, vector<15x64xbf16>
    tpu.vector_store %arg5[%c1, %c0_3], %2 {strides = array<i32>} : memref<32x192xbf16, #tpu.memory_space<vmem>>, vector<15x64xbf16>,
    %c0_4 = arith.constant 0 : index
    %c0_5 = arith.constant 0 : index
    %4 = vector.load %arg1[%c0_4, %c0_5] : memref<32x64xbf16, #tpu.memory_space<vmem>>, vector<16x64xbf16>
    %c0_6 = arith.constant 0 : index
    %c64 = arith.constant 64 : index
    %5 = vector.load %arg5[%c0_6, %c64] : memref<32x192xbf16, #tpu.memory_space<vmem>>, vector<16x64xbf16>
    tpu.vector_store %arg5[%c0_6, %c64], %4 {strides = array<i32>} : memref<32x192xbf16, #tpu.memory_space<vmem>>, vector<16x64xbf16>,
    %c1_7 = arith.constant 1 : index
    %c0_8 = arith.constant 0 : index
    %6 = vector.load %arg1[%c1_7, %c0_8] : memref<32x64xbf16, #tpu.memory_space<vmem>>, vector<15x64xbf16>
    %c0_9 = arith.constant 0 : index
    %c128 = arith.constant 128 : index
    %7 = vector.load %arg5[%c0_9, %c128] : memref<32x192xbf16, #tpu.memory_space<vmem>>, vector<15x64xbf16>
    tpu.vector_store %arg5[%c0_9, %c128], %6 {strides = array<i32>} : memref<32x192xbf16, #tpu.memory_space<vmem>>, vector<15x64xbf16>,
    %cst_10 = arith.constant 0.000000e+00 : bf16
    %8 = vector.broadcast %cst_10 : bf16 to vector<1x64xbf16>
    %c15 = arith.constant 15 : index
    %c128_11 = arith.constant 128 : index
    %9 = vector.load %arg5[%c15, %c128_11] : memref<32x192xbf16, #tpu.memory_space<vmem>>, vector<1x64xbf16>
    tpu.vector_store %arg5[%c15, %c128_11], %8 {strides = array<i32>} : memref<32x192xbf16, #tpu.memory_space<vmem>>, vector<1x64xbf16>,
    %cst_12 = arith.constant 0.000000e+00 : bf16
    %10 = vector.broadcast %cst_12 : bf16 to vector<1x64xbf16>
    %c16 = arith.constant 16 : index
    %c0_13 = arith.constant 0 : index
    %11 = vector.load %arg5[%c16, %c0_13] : memref<32x192xbf16, #tpu.memory_space<vmem>>, vector<1x64xbf16>
    tpu.vector_store %arg5[%c16, %c0_13], %10 {strides = array<i32>} : memref<32x192xbf16, #tpu.memory_space<vmem>>, vector<1x64xbf16>,
    %c16_14 = arith.constant 16 : index
    %c0_15 = arith.constant 0 : index
    %12 = vector.load %arg1[%c16_14, %c0_15] : memref<32x64xbf16, #tpu.memory_space<vmem>>, vector<15x64xbf16>
    %c17 = arith.constant 17 : index
    %c0_16 = arith.constant 0 : index
    %13 = vector.load %arg5[%c17, %c0_16] : memref<32x192xbf16, #tpu.memory_space<vmem>>, vector<15x64xbf16>
    tpu.vector_store %arg5[%c17, %c0_16], %12 {strides = array<i32>} : memref<32x192xbf16, #tpu.memory_space<vmem>>, vector<15x64xbf16>,
    %c16_17 = arith.constant 16 : index
    %c0_18 = arith.constant 0 : index
    %14 = vector.load %arg1[%c16_17, %c0_18] : memref<32x64xbf16, #tpu.memory_space<vmem>>, vector<16x64xbf16>
    %c16_19 = arith.constant 16 : index
    %c64_20 = arith.constant 64 : index
    %15 = vector.load %arg5[%c16_19, %c64_20] : memref<32x192xbf16, #tpu.memory_space<vmem>>, vector<16x64xbf16>
    tpu.vector_store %arg5[%c16_19, %c64_20], %14 {strides = array<i32>} : memref<32x192xbf16, #tpu.memory_space<vmem>>, vector<16x64xbf16>,
    %c17_21 = arith.constant 17 : index
    %c0_22 = arith.constant 0 : index
    %16 = vector.load %arg1[%c17_21, %c0_22] : memref<32x64xbf16, #tpu.memory_space<vmem>>, vector<15x64xbf16>
    %c16_23 = arith.constant 16 : index
    %c128_24 = arith.constant 128 : index
    %17 = vector.load %arg5[%c16_23, %c128_24] : memref<32x192xbf16, #tpu.memory_space<vmem>>, vector<15x64xbf16>
    tpu.vector_store %arg5[%c16_23, %c128_24], %16 {strides = array<i32>} : memref<32x192xbf16, #tpu.memory_space<vmem>>, vector<15x64xbf16>,
    %cst_25 = arith.constant 0.000000e+00 : bf16
    %18 = vector.broadcast %cst_25 : bf16 to vector<1x64xbf16>
    %c31 = arith.constant 31 : index
    %c128_26 = arith.constant 128 : index
    %19 = vector.load %arg5[%c31, %c128_26] : memref<32x192xbf16, #tpu.memory_space<vmem>>, vector<1x64xbf16>
    tpu.vector_store %arg5[%c31, %c128_26], %18 {strides = array<i32>} : memref<32x192xbf16, #tpu.memory_space<vmem>>, vector<1x64xbf16>,
    %c0_27 = arith.constant 0 : index
    %c0_28 = arith.constant 0 : index
    %20 = vector.load %arg5[%c0_27, %c0_28] : memref<32x192xbf16, #tpu.memory_space<vmem>>, vector<32x192xbf16>
    %c0_29 = arith.constant 0 : index
    %c0_30 = arith.constant 0 : index
    %21 = vector.load %arg2[%c0_29, %c0_30] : memref<192x128xbf16, #tpu.memory_space<vmem>>, vector<192x128xbf16>
    %cst_31 = arith.constant dense<0.000000e+00> : vector<32x128xf32>
    %22 = tpu.matmul %20, %21, %cst_31 {dimension_numbers = #tpu.dot_dimension_numbers<[1], [0], [0], [1], [0, 0, 1, 1], [], []>} : vector<32x192xbf16>, vector<192x128xbf16>, vector<32x128xf32> -> vector<32x128xf32>
    %c0_32 = arith.constant 0 : index
    %c0_33 = arith.constant 0 : index
    %23 = vector.load %arg3[%c0_32, %c0_33] : memref<1x128xf32, #tpu.memory_space<vmem>>, vector<1x128xf32>
    %24 = vector.broadcast %23 : vector<1x128xf32> to vector<32x128xf32>
    %25 = arith.addf %22, %24 : vector<32x128xf32>
    %cst_34 = arith.constant 0.000000e+00 : f32
    %26 = vector.broadcast %cst_34 : f32 to vector<32x128xf32>
    %27 = arith.maximumf %25, %26 : vector<32x128xf32>
    %28 = arith.truncf %27 : vector<32x128xf32> to vector<32x128xbf16>
    %c0_35 = arith.constant 0 : index
    %c0_36 = arith.constant 0 : index
    %29 = vector.load %arg4[%c0_35, %c0_36] : memref<32x128xbf16, #tpu.memory_space<vmem>>, vector<32x128xbf16>
    tpu.vector_store %arg4[%c0_35, %c0_36], %28 {strides = array<i32>} : memref<32x128xbf16, #tpu.memory_space<vmem>>, vector<32x128xbf16>,
    return
  }
  func.func @transform_0(%arg0: i32) -> (i32, i32) {
    %c0_i32 = arith.constant 0 : i32
    %c0_i32_0 = arith.constant 0 : i32
    return %arg0, %c0_i32 : i32, i32
  }
  func.func @transform_1(%arg0: i32) -> (i32, i32) {
    %c0_i32 = arith.constant 0 : i32
    %c0_i32_0 = arith.constant 0 : i32
    %c0_i32_1 = arith.constant 0 : i32
    return %c0_i32, %c0_i32_0 : i32, i32
  }
  func.func @transform_2(%arg0: i32) -> (i32, i32) {
    %c0_i32 = arith.constant 0 : i32
    %c0_i32_0 = arith.constant 0 : i32
    %c0_i32_1 = arith.constant 0 : i32
    return %c0_i32, %c0_i32_0 : i32, i32
  }
  func.func @transform_3(%arg0: i32) -> (i32, i32) {
    %c0_i32 = arith.constant 0 : i32
    %c0_i32_0 = arith.constant 0 : i32
    return %arg0, %c0_i32 : i32, i32
  }
}

module attributes {stable_mosaic.version = 11 : i64} {
  func.func @kernel(%arg0: i32, %arg1: memref<32x64xbf16, #tpu.memory_space<vmem>>, %arg2: memref<192x128xbf16, #tpu.memory_space<vmem>>, %arg3: memref<1x128xf32, #tpu.memory_space<vmem>>, %arg4: memref<32x128xbf16, #tpu.memory_space<vmem>>, %arg5: memref<32x192xbf16, #tpu.memory_space<vmem>>) attributes {dimension_semantics = [#tpu.dimension_semantics<parallel>], iteration_bounds = array<i64: 1>, scalar_prefetch = 0 : i64, scratch_operands = 1 : i64, tpu.core_type = #tpu.core_type<tc>, window_params = [{transform_indices = @transform_0, window_bounds = array<i64: 32, 64>}, {pipeline_mode = #tpu.pipeline_mode<synchronous>, transform_indices = @transform_1, window_bounds = array<i64: 192, 128>}, {pipeline_mode = #tpu.pipeline_mode<synchronous>, transform_indices = @transform_2, window_bounds = array<i64: 1, 128>}, {transform_indices = @transform_3, window_bounds = array<i64: 32, 128>}]} {
    %cst = arith.constant 0.000000e+00 : bf16
    %0 = vector.broadcast %cst : bf16 to vector<1x64xbf16>
    %c0 = arith.constant 0 : index
    %c0_0 = arith.constant 0 : index
    %1 = vector.load %arg5[%c0, %c0_0] : memref<32x192xbf16, #tpu.memory_space<vmem>>, vector<1x64xbf16>
    tpu.vector_store %arg5[%c0, %c0_0], %0 {strides = array<i32>} : memref<32x192xbf16, #tpu.memory_space<vmem>>, vector<1x64xbf16>,
    %c0_1 = arith.constant 0 : index
    %c0_2 = arith.constant 0 : index
    %2 = vector.load %arg1[%c0_1, %c0_2] : memref<32x64xbf16, #tpu.memory_space<vmem>>, vector<15x64xbf16>
    %c1 = arith.constant 1 : index
    %c0_3 = arith.constant 0 : index
    %3 = vector.load %arg5[%c1, %c0_3] : memref<32x192xbf16, #tpu.memory_space<vmem>>, vector<15x64xbf16>
    tpu.vector_store %arg5[%c1, %c0_3], %2 {strides = array<i32>} : memref<32x192xbf16, #tpu.memory_space<vmem>>, vector<15x64xbf16>,
    %c0_4 = arith.constant 0 : index
    %c0_5 = arith.constant 0 : index
    %4 = vector.load %arg1[%c0_4, %c0_5] : memref<32x64xbf16, #tpu.memory_space<vmem>>, vector<16x64xbf16>
    %c0_6 = arith.constant 0 : index
    %c64 = arith.constant 64 : index
    %5 = vector.load %arg5[%c0_6, %c64] : memref<32x192xbf16, #tpu.memory_space<vmem>>, vector<16x64xbf16>
    tpu.vector_store %arg5[%c0_6, %c64], %4 {strides = array<i32>} : memref<32x192xbf16, #tpu.memory_space<vmem>>, vector<16x64xbf16>,
    %c1_7 = arith.constant 1 : index
    %c0_8 = arith.constant 0 : index
    %6 = vector.load %arg1[%c1_7, %c0_8] : memref<32x64xbf16, #tpu.memory_space<vmem>>, vector<15x64xbf16>
    %c0_9 = arith.constant 0 : index
    %c128 = arith.constant 128 : index
    %7 = vector.load %arg5[%c0_9, %c128] : memref<32x192xbf16, #tpu.memory_space<vmem>>, vector<15x64xbf16>
    tpu.vector_store %arg5[%c0_9, %c128], %6 {strides = array<i32>} : memref<32x192xbf16, #tpu.memory_space<vmem>>, vector<15x64xbf16>,
    %cst_10 = arith.constant 0.000000e+00 : bf16
    %8 = vector.broadcast %cst_10 : bf16 to vector<1x64xbf16>
    %c15 = arith.constant 15 : index
    %c128_11 = arith.constant 128 : index
    %9 = vector.load %arg5[%c15, %c128_11] : memref<32x192xbf16, #tpu.memory_space<vmem>>, vector<1x64xbf16>
    tpu.vector_store %arg5[%c15, %c128_11], %8 {strides = array<i32>} : memref<32x192xbf16, #tpu.memory_space<vmem>>, vector<1x64xbf16>,
    %cst_12 = arith.constant 0.000000e+00 : bf16
    %10 = vector.broadcast %cst_12 : bf16 to vector<1x64xbf16>
    %c16 = arith.constant 16 : index
    %c0_13 = arith.constant 0 : index
    %11 = vector.load %arg5[%c16, %c0_13] : memref<32x192xbf16, #tpu.memory_space<vmem>>, vector<1x64xbf16>
    tpu.vector_store %arg5[%c16, %c0_13], %10 {strides = array<i32>} : memref<32x192xbf16, #tpu.memory_space<vmem>>, vector<1x64xbf16>,
    %c16_14 = arith.constant 16 : index
    %c0_15 = arith.constant 0 : index
    %12 = vector.load %arg1[%c16_14, %c0_15] : memref<32x64xbf16, #tpu.memory_space<vmem>>, vector<15x64xbf16>
    %c17 = arith.constant 17 : index
    %c0_16 = arith.constant 0 : index
    %13 = vector.load %arg5[%c17, %c0_16] : memref<32x192xbf16, #tpu.memory_space<vmem>>, vector<15x64xbf16>
    tpu.vector_store %arg5[%c17, %c0_16], %12 {strides = array<i32>} : memref<32x192xbf16, #tpu.memory_space<vmem>>, vector<15x64xbf16>,
    %c16_17 = arith.constant 16 : index
    %c0_18 = arith.constant 0 : index
    %14 = vector.load %arg1[%c16_17, %c0_18] : memref<32x64xbf16, #tpu.memory_space<vmem>>, vector<16x64xbf16>
    %c16_19 = arith.constant 16 : index
    %c64_20 = arith.constant 64 : index
    %15 = vector.load %arg5[%c16_19, %c64_20] : memref<32x192xbf16, #tpu.memory_space<vmem>>, vector<16x64xbf16>
    tpu.vector_store %arg5[%c16_19, %c64_20], %14 {strides = array<i32>} : memref<32x192xbf16, #tpu.memory_space<vmem>>, vector<16x64xbf16>,
    %c17_21 = arith.constant 17 : index
    %c0_22 = arith.constant 0 : index
    %16 = vector.load %arg1[%c17_21, %c0_22] : memref<32x64xbf16, #tpu.memory_space<vmem>>, vector<15x64xbf16>
    %c16_23 = arith.constant 16 : index
    %c128_24 = arith.constant 128 : index
    %17 = vector.load %arg5[%c16_23, %c128_24] : memref<32x192xbf16, #tpu.memory_space<vmem>>, vector<15x64xbf16>
    tpu.vector_store %arg5[%c16_23, %c128_24], %16 {strides = array<i32>} : memref<32x192xbf16, #tpu.memory_space<vmem>>, vector<15x64xbf16>,
    %cst_25 = arith.constant 0.000000e+00 : bf16
    %18 = vector.broadcast %cst_25 : bf16 to vector<1x64xbf16>
    %c31 = arith.constant 31 : index
    %c128_26 = arith.constant 128 : index
    %19 = vector.load %arg5[%c31, %c128_26] : memref<32x192xbf16, #tpu.memory_space<vmem>>, vector<1x64xbf16>
    tpu.vector_store %arg5[%c31, %c128_26], %18 {strides = array<i32>} : memref<32x192xbf16, #tpu.memory_space<vmem>>, vector<1x64xbf16>,
    %c0_27 = arith.constant 0 : index
    %c0_28 = arith.constant 0 : index
    %20 = vector.load %arg5[%c0_27, %c0_28] : memref<32x192xbf16, #tpu.memory_space<vmem>>, vector<32x192xbf16>
    %c0_29 = arith.constant 0 : index
    %c0_30 = arith.constant 0 : index
    %21 = vector.load %arg2[%c0_29, %c0_30] : memref<192x128xbf16, #tpu.memory_space<vmem>>, vector<192x128xbf16>
    %cst_31 = arith.constant dense<0.000000e+00> : vector<32x128xf32>
    %22 = tpu.matmul %20, %21, %cst_31 {dimension_numbers = #tpu.dot_dimension_numbers<[1], [0], [0], [1], [0, 0, 1, 1], [], []>} : vector<32x192xbf16>, vector<192x128xbf16>, vector<32x128xf32> -> vector<32x128xf32>
    %c0_32 = arith.constant 0 : index
    %c0_33 = arith.constant 0 : index
    %23 = vector.load %arg3[%c0_32, %c0_33] : memref<1x128xf32, #tpu.memory_space<vmem>>, vector<1x128xf32>
    %24 = vector.broadcast %23 : vector<1x128xf32> to vector<32x128xf32>
    %25 = arith.addf %22, %24 : vector<32x128xf32>
    %cst_34 = arith.constant 0.000000e+00 : f32
    %26 = vector.broadcast %cst_34 : f32 to vector<32x128xf32>
    %27 = arith.maximumf %25, %26 : vector<32x128xf32>
    %28 = arith.truncf %27 : vector<32x128xf32> to vector<32x128xbf16>
    %c0_35 = arith.constant 0 : index
    %c0_36 = arith.constant 0 : index
    %29 = vector.load %arg4[%c0_35, %c0_36] : memref<32x128xbf16, #tpu.memory_space<vmem>>, vector<32x128xbf16>
    tpu.vector_store %arg4[%c0_35, %c0_36], %28 {strides = array<i32>} : memref<32x128xbf16, #tpu.memory_space<vmem>>, vector<32x128xbf16>,
    return
  }
  func.func @transform_0(%arg0: i32) -> (i32, i32) {
    %c0_i32 = arith.constant 0 : i32
    %c0_i32_0 = arith.constant 0 : i32
    return %arg0, %c0_i32 : i32, i32
  }
  func.func @transform_1(%arg0: i32) -> (i32, i32) {
    %c0_i32 = arith.constant 0 : i32
    %c0_i32_0 = arith.constant 0 : i32
    %c0_i32_1 = arith.constant 0 : i32
    return %c0_i32, %c0_i32_0 : i32, i32
  }
  func.func @transform_2(%arg0: i32) -> (i32, i32) {
    %c0_i32 = arith.constant 0 : i32
    %c0_i32_0 = arith.constant 0 : i32
    %c0_i32_1 = arith.constant 0 : i32
    return %c0_i32, %c0_i32_0 : i32, i32
  }
  func.func @transform_3(%arg0: i32) -> (i32, i32) {
    %c0_i32 = arith.constant 0 : i32
    %c0_i32_0 = arith.constant 0 : i32
    return %arg0, %c0_i32 : i32, i32
  }
}

</mosaic_0001>

<llo_original>
// kernel: tpu_custom_call.1
$region0: #{tpu_custom_call.1}
  #allocation0 [shape = 'u32[]', space=smem, size = 0x4, offset = 0x4, fixed_abs, tag = 'smem constant byte address 0x4 - core index']
  #allocation1 [shape = 'u32[144,128]{1,0:T(1,128)}', space=vmem, size = 0x12000, scoped, tag = 'internal scratch']
  #allocation2 [shape = 'bf16[32,192]{1,0:T(16,128)(2,1)}', space=vmem, size = 0x4000, scoped, tag = 'scratch operand']
  %s0 = inlined_call_operand.hbm [shape: bf16[32,64], index: 0, kind: input, shape index: {}]
  %s1 = inlined_call_operand.hbm [shape: bf16[192,128], index: 1, kind: input, shape index: {}]
  %s2 = inlined_call_operand.vmem [shape: f32[1,128], index: 2, kind: input, shape index: {}]
  %s3 = inlined_call_operand.hbm [shape: bf16[32,128], index: 3, kind: output, shape index: {}]
  %s4 = sld [smem:[#allocation0]]
  $region30: #{tpu_custom_call.1} parent=0
    _
  %s6 = ssub.s32 1, %s4
  %s7 = scalar_select 0, %s6, %s4
  $region1: #{tpu_custom_call.1} parent=0
    #allocation3 [shape = 'u8[8192]{0}', space=vmem, size = 0x2000, scoped, tag = 'input window, operand 0, single buffered']
    #allocation4 [shape = 's32[1]{0}', space=sflag, size = 0x4, scoped, tag = 'scoped memory for tpu_custom_call.1']
    #allocation5 [shape = 's32[1]{0}', space=sflag, size = 0x4, scoped, tag = 'scoped memory for tpu_custom_call.1']
    #allocation6 [shape = 'u8[49152]{0}', space=vmem, size = 0xc000, scoped, tag = 'input window, operand 1, single buffered']
    #allocation7 [shape = 's32[1]{0}', space=sflag, size = 0x4, scoped, tag = 'scoped memory for tpu_custom_call.1']
    #allocation8 [shape = 'u8[8192]{0}', space=vmem, size = 0x2000, scoped, tag = 'output window, operand 0, single buffered']
    %8 = vsyncpa [#allocation4], 0
    %9 = vsyncpa [#allocation7], 0
    %10 = vsyncpa [#allocation5], 0
    // Predicated region
    $region2: #{tpu_custom_call.1} parent=1 // pred_check
      _
    $region3: #{tpu_custom_call.1} parent=1 // pred_check_branch
      %12 = sbr.rel (0) target = $region5
    $region4: #{tpu_custom_call.1} parent=1 // pred_region
      %s14 = ssub.s32 256, 256
      %15 = vsyncadd [#allocation4], %s14
      %s16 = sshll.u32 [#allocation3], 4
      %s17 = int_to_ptr.vmem [resolvable:$true] %s16
      %22 = dma.hbm_to_vmem [thread:$0]  %s0, 256, %s17, [#allocation4], 64, 64, 4
    $region5: #{tpu_custom_call.1} parent=1 // pred_fallthru
      _
    // Predicated region
    $region6: #{tpu_custom_call.1} parent=1 // pred_check
      _
    $region7: #{tpu_custom_call.1} parent=1 // pred_check_branch
      %24 = sbr.rel (0) target = $region9
    $region8: #{tpu_custom_call.1} parent=1 // pred_region
      %s26 = ssub.s32 1536, 1536
      %27 = vsyncadd [#allocation7], %s26
      %s28 = sshll.u32 [#allocation6], 4
      %s29 = int_to_ptr.vmem [resolvable:$true] %s28
      %34 = dma.hbm_to_vmem [thread:$0]  %s1, 1536, %s29, [#allocation7], 64, 64, 4
    $region9: #{tpu_custom_call.1} parent=1 // pred_fallthru
      _
    // Predicated region
    $region10: #{tpu_custom_call.1} parent=1 // pred_check
      _
    $region11: #{tpu_custom_call.1} parent=1 // pred_check_branch
      %36 = sbr.rel (0) target = $region13
    $region12: #{tpu_custom_call.1} parent=1 // pred_region
      _
    $region13: #{tpu_custom_call.1} parent=1 // pred_fallthru
      _
    // Predicated region
    $region14: #{tpu_custom_call.1} parent=1 // pred_check
      _
    $region15: #{tpu_custom_call.1} parent=1 // pred_check_branch
      %38 = sbr.rel (0) target = $region17
    $region16: #{tpu_custom_call.1} parent=1 // pred_region
      %39 = dma.done [#allocation4], 256
    $region17: #{tpu_custom_call.1} parent=1 // pred_fallthru
      _
    // Predicated region
    $region18: #{tpu_custom_call.1} parent=1 // pred_check
      _
    $region19: #{tpu_custom_call.1} parent=1 // pred_check_branch
      %41 = sbr.rel (0) target = $region21
    $region20: #{tpu_custom_call.1} parent=1 // pred_region
      %42 = dma.done [#allocation7], 1536
    $region21: #{tpu_custom_call.1} parent=1 // pred_fallthru
      _
    %vm44 = vcmask 516096
    %vm45 = vsmask.f32 256
    %vm46 = vmand %vm44, %vm45
    %v47 = vld [vmem:[#allocation2] sm:$0x1]
    %v48 = vsel %vm46, 0, %v47
    %49 = vst [vmem:[#allocation2] sm:$0x1] %v48
    %v50 = vld [vmem:[#allocation3] sm:$0xf]
    %v51 = vld [vmem:[#allocation3 + $0x4] sm:$0xf]
    %v54 = vunpack.c.l.b16 %v50
    %v55 = vunpack.c.l.b16 %v51
    %v56 = vpack.c.b16 %v55, %v54
    %v58 = vshrl.u32 %v56, 16
    %v60 = vrot.slane %v58, 7
    %v61 = vshll.u32 %v56, 16
    %v63 = vor.u32 %v60, %v61
    %vm65 = vcmask 523264
    %vm66 = vsmask.f32 7938
    %vm67 = vmand %vm65, %vm66
    %v68 = vld [vmem:[#allocation2] sm:$0xff]
    %v69 = vsel %vm67, %v63, %v68
    %70 = vst [vmem:[#allocation2] sm:$0xff] %v69
    %v71 = vld [vmem:[#allocation3] sm:$0xf]
    %v72 = vld [vmem:[#allocation3 + $0x4] sm:$0xf]
    %v75 = vunpack.c.l.b16 %v71
    %v76 = vunpack.c.l.b16 %v72
    %v77 = vpack.c.b16 %v76, %v75
    %78 = vrot.lane.b32.xlu0 %v77, 64
    %v79 = vpop.permute.xlu0 %78
    %vm81 = vcmask 1048064
    %82 = vst.msk [vmem:[#allocation2] sm:$0xff] %vm81, %v79
    %v83 = vld [vmem:[#allocation3] sm:$0xf]
    %v84 = vld [vmem:[#allocation3 + $0x4] sm:$0xf]
    %v87 = vunpack.c.l.b16 %v83
    %v88 = vunpack.c.l.b16 %v84
    %v89 = vpack.c.b16 %v88, %v87
    %v91 = vshrl.u32 %v89, 16
    %v93 = vshll.u32 %v89, 16
    %v95 = vrot.slane %v93, 1
    %v96 = vor.u32 %v91, %v95
    %vm98 = vsmask.f32 7424
    %vm99 = vmand %vm65, %vm98
    %v100 = vld [vmem:[#allocation2 + $0x8] sm:$0xff]
    %v101 = vsel %vm99, %v96, %v100
    %102 = vst [vmem:[#allocation2 + $0x8] sm:$0xff] %v101
    %vm103 = vcmask 523271
    %vm104 = vsmask.f32 7966
    %vm105 = vmand %vm103, %vm104
    %v106 = vld [vmem:[#allocation2 + $0x8] sm:$0x80]
    %v107 = vsel %vm105, 0, %v106
    %108 = vst [vmem:[#allocation2 + $0x8] sm:$0x80] %v107
    %v109 = vld [vmem:[#allocation2 + $0x10] sm:$0x1]
    %v110 = vsel %vm46, 0, %v109
    %111 = vst [vmem:[#allocation2 + $0x10] sm:$0x1] %v110
    %v112 = vld [vmem:[#allocation3 + $0x8] sm:$0xf]
    %v113 = vld [vmem:[#allocation3 + $0xc] sm:$0xf]
    %v116 = vunpack.c.l.b16 %v112
    %v117 = vunpack.c.l.b16 %v113
    %v118 = vpack.c.b16 %v117, %v116
    %v120 = vshrl.u32 %v118, 16
    %v122 = vrot.slane %v120, 7
    %v123 = vshll.u32 %v118, 16
    %v125 = vor.u32 %v122, %v123
    %v127 = vld [vmem:[#allocation2 + $0x10] sm:$0xff]
    %v128 = vsel %vm67, %v125, %v127
    %129 = vst [vmem:[#allocation2 + $0x10] sm:$0xff] %v128
    %v130 = vld [vmem:[#allocation3 + $0x8] sm:$0xf]
    %v131 = vld [vmem:[#allocation3 + $0xc] sm:$0xf]
    %v134 = vunpack.c.l.b16 %v130
    %v135 = vunpack.c.l.b16 %v131
    %v136 = vpack.c.b16 %v135, %v134
    %137 = vrot.lane.b32.xlu0 %v136, 64
    %v138 = vpop.permute.xlu0 %137
    %140 = vst.msk [vmem:[#allocation2 + $0x10] sm:$0xff] %vm81, %v138
    %v141 = vld [vmem:[#allocation3 + $0x8] sm:$0xf]
    %v142 = vld [vmem:[#allocation3 + $0xc] sm:$0xf]
    %v145 = vunpack.c.l.b16 %v141
    %v146 = vunpack.c.l.b16 %v142
    %v147 = vpack.c.b16 %v146, %v145
    %v149 = vshrl.u32 %v147, 16
    %v151 = vshll.u32 %v147, 16
    %v153 = vrot.slane %v151, 1
    %v154 = vor.u32 %v149, %v153
    %v156 = vld [vmem:[#allocation2 + $0x18] sm:$0xff]
    %v157 = vsel %vm99, %v154, %v156
    %158 = vst [vmem:[#allocation2 + $0x18] sm:$0xff] %v157
    %v159 = vld [vmem:[#allocation2 + $0x18] sm:$0x80]
    %v160 = vsel %vm105, 0, %v159
    %161 = vst [vmem:[#allocation2 + $0x18] sm:$0x80] %v160
    %v162 = vld [vmem:[#allocation2] sm:$0xff]
    %v163 = vld [vmem:[#allocation2 + $0x8] sm:$0xff]
    %v164 = vld [vmem:[#allocation2 + $0x10] sm:$0xff]
    %v165 = vld [vmem:[#allocation2 + $0x18] sm:$0xff]
    %v166 = vld [vmem:[#allocation6] sm:$0xf]
    %v167 = vld [vmem:[#allocation6 + $0x4] sm:$0xf]
    %v168 = vld [vmem:[#allocation6 + $0x8] sm:$0xf]
    %v169 = vld [vmem:[#allocation6 + $0xc] sm:$0xf]
    %v170 = vld [vmem:[#allocation6 + $0x10] sm:$0xf]
    %v171 = vld [vmem:[#allocation6 + $0x14] sm:$0xf]
    %v172 = vld [vmem:[#allocation6 + $0x18] sm:$0xf]
    %v173 = vld [vmem:[#allocation6 + $0x1c] sm:$0xf]
    %v174 = vld [vmem:[#allocation6 + $0x20] sm:$0xf]
    %v175 = vld [vmem:[#allocation6 + $0x24] sm:$0xf]
    %v176 = vld [vmem:[#allocation6 + $0x28] sm:$0xf]
    %v177 = vld [vmem:[#allocation6 + $0x2c] sm:$0xf]
    %v178 = vld [vmem:[#allocation6 + $0x30] sm:$0xf]
    %v179 = vld [vmem:[#allocation6 + $0x34] sm:$0xf]
    %v180 = vld [vmem:[#allocation6 + $0x38] sm:$0xf]
    %v181 = vld [vmem:[#allocation6 + $0x3c] sm:$0xf]
    %v182 = vld [vmem:[#allocation6 + $0x40] sm:$0xf]
    %v183 = vld [vmem:[#allocation6 + $0x44] sm:$0xf]
    %v184 = vld [vmem:[#allocation6 + $0x48] sm:$0xf]
    %v185 = vld [vmem:[#allocation6 + $0x4c] sm:$0xf]
    %v186 = vld [vmem:[#allocation6 + $0x50] sm:$0xf]
    %v187 = vld [vmem:[#allocation6 + $0x54] sm:$0xf]
    %v188 = vld [vmem:[#allocation6 + $0x58] sm:$0xf]
    %v189 = vld [vmem:[#allocation6 + $0x5c] sm:$0xf]
    %v190 = vld [vmem:[%s2] sm:$0x1]
    %v192 = vlaneseq
    %v193 = vshrl.u32 %v192, 7
    %v194 = vsub.s32 0, %v193
    %v195 = vrot.slane %v190, %v194
    %v221 = vunpack.c.l.b16 %v166
    %v222 = vunpack.c.l.b16 %v167
    %v223 = vunpack.c.l.b16 %v168
    %v224 = vunpack.c.l.b16 %v169
    %v225 = vunpack.c.l.b16 %v170
    %v226 = vunpack.c.l.b16 %v171
    %v227 = vunpack.c.l.b16 %v172
    %v228 = vunpack.c.l.b16 %v173
    %v229 = vunpack.c.l.b16 %v174
    %v230 = vunpack.c.l.b16 %v175
    %v231 = vunpack.c.l.b16 %v176
    %v232 = vunpack.c.l.b16 %v177
    %v233 = vunpack.c.l.b16 %v178
    %v234 = vunpack.c.l.b16 %v179
    %v235 = vunpack.c.l.b16 %v180
    %v236 = vunpack.c.l.b16 %v181
    %v237 = vunpack.c.l.b16 %v182
    %v238 = vunpack.c.l.b16 %v183
    %v239 = vunpack.c.l.b16 %v184
    %v240 = vunpack.c.l.b16 %v185
    %v241 = vunpack.c.l.b16 %v186
    %v242 = vunpack.c.l.b16 %v187
    %v243 = vunpack.c.l.b16 %v188
    %v244 = vunpack.c.l.b16 %v189
    %v245 = vpack.c.b16 %v222, %v221
    %v246 = vpack.c.b16 %v224, %v223
    %v247 = vpack.c.b16 %v226, %v225
    %v248 = vpack.c.b16 %v228, %v227
    %v249 = vpack.c.b16 %v230, %v229
    %v250 = vpack.c.b16 %v232, %v231
    %v251 = vpack.c.b16 %v234, %v233
    %v252 = vpack.c.b16 %v236, %v235
    %v253 = vpack.c.b16 %v238, %v237
    %v254 = vpack.c.b16 %v240, %v239
    %v255 = vpack.c.b16 %v242, %v241
    %v256 = vpack.c.b16 %v244, %v243
    %vm269 = vcmask 523264
    %v271 = vsel %vm269, %v163, 0
    %v274 = vsel %vm269, %v165, 0
    %276 = vmatprep.subr.bf16.mxu0 0
    %277 = vmatpush1.bf16.msra.mxu0 %v245
    %278 = vmatprep.subr.bf16.mxu0 0
    %279 = vmatpush1.bf16.msra.mxu0 %v246
    %280 = vmatprep.subr.bf16.mxu0 0
    %281 = vmatpush1.bf16.msra.mxu0 %v247
    %282 = vmatprep.subr.bf16.mxu0 0
    %283 = vmatpush1.bf16.msra.mxu0 %v248
    %284 = vmatprep.subr.bf16.mxu0 0
    %285 = vmatpush1.bf16.msra.mxu0 %v249
    %286 = vmatprep.subr.bf16.mxu0 0
    %287 = vmatpush1.bf16.msra.mxu0 %v250
    %288 = vmatprep.subr.bf16.mxu0 0
    %289 = vmatpush1.bf16.msra.mxu0 %v251
    %290 = vmatprep.subr.bf16.mxu0 0
    %291 = vmatpush1.bf16.msra.mxu0 %v252
    %292 = vmatprep.subr.bf16.mxu0 0
    %293 = vmatpush1.bf16.msra.mxu0 %v253
    %294 = vmatprep.subr.bf16.mxu0 0
    %295 = vmatpush1.bf16.msra.mxu0 %v254
    %296 = vmatprep.subr.bf16.mxu0 0
    %297 = vmatpush1.bf16.msra.mxu0 %v255
    %298 = vmatprep.subr.bf16.mxu0 0
    %299 = vmatpush1.bf16.msra.mxu0 %v256
    %300 = vmatprep.subr.bf16.mxu0 0
    %301 = vmatpush1.bf16.msra.mxu0 0
    %302 = vmatprep.subr.bf16.mxu0 0
    %303 = vmatpush1.bf16.msra.mxu0 0
    %304 = vmatprep.subr.bf16.mxu0 0
    %305 = vmatpush1.bf16.msra.mxu0 0
    %306 = vmatprep.subr.bf16.mxu0 0
    %307 = vmatpush1.bf16.msra.mxu0 0
    %308 = vmatprep.mubr.bf16.mxu0 %v271
    %309 = vmatmul.mubr.bf16.gmra.mrb[0].mxu0 %v162
    %v310 = vpop.f32.mrb[0].mxu0
    %v311 = vadd.f32 %v195, %v310
    %v312 = vpop.f32.mrb[0].mxu0
    %v313 = vpop.f32.mrb[0].mxu0
    %v314 = vadd.f32 %v195, %v313
    %v315 = vpop.f32.mrb[0].mxu0
    %316 = vmatprep.mubr.bf16.mxu0 %v274
    %317 = vmatmul.mubr.bf16.gmra.mrb[0].mxu0 %v164
    %v318 = vpop.f32.mrb[0].mxu0
    %v319 = vadd.f32 %v195, %v318
    %v320 = vpop.f32.mrb[0].mxu0
    %v321 = vpop.f32.mrb[0].mxu0
    %v322 = vadd.f32 %v195, %v321
    %v323 = vpop.f32.mrb[0].mxu0
    %324 = vdwg.mxu0
    %v325 = vmax.f32 %v311, 0.0
    %v326 = vmax.f32 %v314, 0.0
    %v327 = vmax.f32 %v319, 0.0
    %v328 = vmax.f32 %v322, 0.0
    %v329 = vpack.c.bf16 %v326, %v325
    %v330 = vpack.c.bf16 %v328, %v327
    %v333 = vunpack.c.l.b16 %v329
    %v334 = vunpack.c.h.b16 %v329
    %v335 = vunpack.c.l.b16 %v330
    %v336 = vunpack.c.h.b16 %v330
    %v337 = vpack.c.b16 %v333, %v333
    %v338 = vpack.c.b16 %v334, %v334
    %v339 = vpack.c.b16 %v335, %v335
    %v340 = vpack.c.b16 %v336, %v336
    %345 = vst [vmem:[#allocation8] sm:$0xf] %v337
    %346 = vst [vmem:[#allocation8 + $0x4] sm:$0xf] %v338
    %347 = vst [vmem:[#allocation8 + $0x8] sm:$0xf] %v339
    %348 = vst [vmem:[#allocation8 + $0xc] sm:$0xf] %v340
    // Predicated region
    $region22: #{tpu_custom_call.1} parent=1 // pred_check
      _
    $region23: #{tpu_custom_call.1} parent=1 // pred_check_branch
      %350 = sbr.rel (0) target = $region25
    $region24: #{tpu_custom_call.1} parent=1 // pred_region
      %s352 = ssub.s32 256, 256
      %353 = vsyncadd [#allocation5], %s352
      %s354 = sshll.u32 [#allocation8], 4
      %s355 = int_to_ptr.vmem [resolvable:$true] %s354
      %360 = dma.vmem_to_hbm [thread:$0]  %s355, 256, %s3, [#allocation5], 64, 64, 4
    $region25: #{tpu_custom_call.1} parent=1 // pred_fallthru
      _
    // Predicated region
    $region26: #{tpu_custom_call.1} parent=1 // pred_check
      _
    $region27: #{tpu_custom_call.1} parent=1 // pred_check_branch
      %362 = sbr.rel (0) target = $region29
    $region28: #{tpu_custom_call.1} parent=1 // pred_region
      %363 = dma.done [#allocation5], 256
    $region29: #{tpu_custom_call.1} parent=1 // pred_fallthru
      _
    %364 = vsyncpa [#allocation4], 1
    %365 = vsyncpa [#allocation7], 1
    %366 = vsyncpa [#allocation5], 1

// kernel: tpu_custom_call.1
$region0: #{tpu_custom_call.1}
  #allocation0 [shape = 'u32[]', space=smem, size = 0x4, offset = 0x4, fixed_abs, tag = 'smem constant byte address 0x4 - core index']
  #allocation1 [shape = 'u32[144,128]{1,0:T(1,128)}', space=vmem, size = 0x12000, scoped, tag = 'internal scratch']
  #allocation2 [shape = 'bf16[32,192]{1,0:T(16,128)(2,1)}', space=vmem, size = 0x4000, scoped, tag = 'scratch operand']
  %s0 = inlined_call_operand.hbm [shape: bf16[32,64], index: 0, kind: input, shape index: {}]
  %s1 = inlined_call_operand.hbm [shape: bf16[192,128], index: 1, kind: input, shape index: {}]
  %s2 = inlined_call_operand.vmem [shape: f32[1,128], index: 2, kind: input, shape index: {}]
  %s3 = inlined_call_operand.hbm [shape: bf16[32,128], index: 3, kind: output, shape index: {}]
  %s4 = sld [smem:[#allocation0]]
  $region30: #{tpu_custom_call.1} parent=0
    _
  %s6 = ssub.s32 1, %s4
  %s7 = scalar_select 0, %s6, %s4
  $region1: #{tpu_custom_call.1} parent=0
    #allocation3 [shape = 'u8[8192]{0}', space=vmem, size = 0x2000, scoped, tag = 'input window, operand 0, single buffered']
    #allocation4 [shape = 's32[1]{0}', space=sflag, size = 0x4, scoped, tag = 'scoped memory for tpu_custom_call.1']
    #allocation5 [shape = 's32[1]{0}', space=sflag, size = 0x4, scoped, tag = 'scoped memory for tpu_custom_call.1']
    #allocation6 [shape = 'u8[49152]{0}', space=vmem, size = 0xc000, scoped, tag = 'input window, operand 1, single buffered']
    #allocation7 [shape = 's32[1]{0}', space=sflag, size = 0x4, scoped, tag = 'scoped memory for tpu_custom_call.1']
    #allocation8 [shape = 'u8[8192]{0}', space=vmem, size = 0x2000, scoped, tag = 'output window, operand 0, single buffered']
    %8 = vsyncpa [#allocation4], 0
    %9 = vsyncpa [#allocation7], 0
    %10 = vsyncpa [#allocation5], 0
    // Predicated region
    $region2: #{tpu_custom_call.1} parent=1 // pred_check
      _
    $region3: #{tpu_custom_call.1} parent=1 // pred_check_branch
      %12 = sbr.rel (0) target = $region5
    $region4: #{tpu_custom_call.1} parent=1 // pred_region
      %s14 = ssub.s32 256, 256
      %15 = vsyncadd [#allocation4], %s14
      %s16 = sshll.u32 [#allocation3], 4
      %s17 = int_to_ptr.vmem [resolvable:$true] %s16
      %22 = dma.hbm_to_vmem [thread:$0]  %s0, 256, %s17, [#allocation4], 64, 64, 4
    $region5: #{tpu_custom_call.1} parent=1 // pred_fallthru
      _
    // Predicated region
    $region6: #{tpu_custom_call.1} parent=1 // pred_check
      _
    $region7: #{tpu_custom_call.1} parent=1 // pred_check_branch
      %24 = sbr.rel (0) target = $region9
    $region8: #{tpu_custom_call.1} parent=1 // pred_region
      %s26 = ssub.s32 1536, 1536
      %27 = vsyncadd [#allocation7], %s26
      %s28 = sshll.u32 [#allocation6], 4
      %s29 = int_to_ptr.vmem [resolvable:$true] %s28
      %34 = dma.hbm_to_vmem [thread:$0]  %s1, 1536, %s29, [#allocation7], 64, 64, 4
    $region9: #{tpu_custom_call.1} parent=1 // pred_fallthru
      _
    // Predicated region
    $region10: #{tpu_custom_call.1} parent=1 // pred_check
      _
    $region11: #{tpu_custom_call.1} parent=1 // pred_check_branch
      %36 = sbr.rel (0) target = $region13
    $region12: #{tpu_custom_call.1} parent=1 // pred_region
      _
    $region13: #{tpu_custom_call.1} parent=1 // pred_fallthru
      _
    // Predicated region
    $region14: #{tpu_custom_call.1} parent=1 // pred_check
      _
    $region15: #{tpu_custom_call.1} parent=1 // pred_check_branch
      %38 = sbr.rel (0) target = $region17
    $region16: #{tpu_custom_call.1} parent=1 // pred_region
      %39 = dma.done [#allocation4], 256
    $region17: #{tpu_custom_call.1} parent=1 // pred_fallthru
      _
    // Predicated region
    $region18: #{tpu_custom_call.1} parent=1 // pred_check
      _
    $region19: #{tpu_custom_call.1} parent=1 // pred_check_branch
      %41 = sbr.rel (0) target = $region21
    $region20: #{tpu_custom_call.1} parent=1 // pred_region
      %42 = dma.done [#allocation7], 1536
    $region21: #{tpu_custom_call.1} parent=1 // pred_fallthru
      _
    %vm44 = vcmask 516096
    %vm45 = vsmask.f32 256
    %vm46 = vmand %vm44, %vm45
    %v47 = vld [vmem:[#allocation2] sm:$0x1]
    %v48 = vsel %vm46, 0, %v47
    %49 = vst [vmem:[#allocation2] sm:$0x1] %v48
    %v50 = vld [vmem:[#allocation3] sm:$0xf]
    %v51 = vld [vmem:[#allocation3 + $0x4] sm:$0xf]
    %v54 = vunpack.c.l.b16 %v50
    %v55 = vunpack.c.l.b16 %v51
    %v56 = vpack.c.b16 %v55, %v54
    %v58 = vshrl.u32 %v56, 16
    %v60 = vrot.slane %v58, 7
    %v61 = vshll.u32 %v56, 16
    %v63 = vor.u32 %v60, %v61
    %vm65 = vcmask 523264
    %vm66 = vsmask.f32 7938
    %vm67 = vmand %vm65, %vm66
    %v68 = vld [vmem:[#allocation2] sm:$0xff]
    %v69 = vsel %vm67, %v63, %v68
    %70 = vst [vmem:[#allocation2] sm:$0xff] %v69
    %v71 = vld [vmem:[#allocation3] sm:$0xf]
    %v72 = vld [vmem:[#allocation3 + $0x4] sm:$0xf]
    %v75 = vunpack.c.l.b16 %v71
    %v76 = vunpack.c.l.b16 %v72
    %v77 = vpack.c.b16 %v76, %v75
    %78 = vrot.lane.b32.xlu0 %v77, 64
    %v79 = vpop.permute.xlu0 %78
    %vm81 = vcmask 1048064
    %82 = vst.msk [vmem:[#allocation2] sm:$0xff] %vm81, %v79
    %v83 = vld [vmem:[#allocation3] sm:$0xf]
    %v84 = vld [vmem:[#allocation3 + $0x4] sm:$0xf]
    %v87 = vunpack.c.l.b16 %v83
    %v88 = vunpack.c.l.b16 %v84
    %v89 = vpack.c.b16 %v88, %v87
    %v91 = vshrl.u32 %v89, 16
    %v93 = vshll.u32 %v89, 16
    %v95 = vrot.slane %v93, 1
    %v96 = vor.u32 %v91, %v95
    %vm98 = vsmask.f32 7424
    %vm99 = vmand %vm65, %vm98
    %v100 = vld [vmem:[#allocation2 + $0x8] sm:$0xff]
    %v101 = vsel %vm99, %v96, %v100
    %102 = vst [vmem:[#allocation2 + $0x8] sm:$0xff] %v101
    %vm103 = vcmask 523271
    %vm104 = vsmask.f32 7966
    %vm105 = vmand %vm103, %vm104
    %v106 = vld [vmem:[#allocation2 + $0x8] sm:$0x80]
    %v107 = vsel %vm105, 0, %v106
    %108 = vst [vmem:[#allocation2 + $0x8] sm:$0x80] %v107
    %v109 = vld [vmem:[#allocation2 + $0x10] sm:$0x1]
    %v110 = vsel %vm46, 0, %v109
    %111 = vst [vmem:[#allocation2 + $0x10] sm:$0x1] %v110
    %v112 = vld [vmem:[#allocation3 + $0x8] sm:$0xf]
    %v113 = vld [vmem:[#allocation3 + $0xc] sm:$0xf]
    %v116 = vunpack.c.l.b16 %v112
    %v117 = vunpack.c.l.b16 %v113
    %v118 = vpack.c.b16 %v117, %v116
    %v120 = vshrl.u32 %v118, 16
    %v122 = vrot.slane %v120, 7
    %v123 = vshll.u32 %v118, 16
    %v125 = vor.u32 %v122, %v123
    %v127 = vld [vmem:[#allocation2 + $0x10] sm:$0xff]
    %v128 = vsel %vm67, %v125, %v127
    %129 = vst [vmem:[#allocation2 + $0x10] sm:$0xff] %v128
    %v130 = vld [vmem:[#allocation3 + $0x8] sm:$0xf]
    %v131 = vld [vmem:[#allocation3 + $0xc] sm:$0xf]
    %v134 = vunpack.c.l.b16 %v130
    %v135 = vunpack.c.l.b16 %v131
    %v136 = vpack.c.b16 %v135, %v134
    %137 = vrot.lane.b32.xlu0 %v136, 64
    %v138 = vpop.permute.xlu0 %137
    %140 = vst.msk [vmem:[#allocation2 + $0x10] sm:$0xff] %vm81, %v138
    %v141 = vld [vmem:[#allocation3 + $0x8] sm:$0xf]
    %v142 = vld [vmem:[#allocation3 + $0xc] sm:$0xf]
    %v145 = vunpack.c.l.b16 %v141
    %v146 = vunpack.c.l.b16 %v142
    %v147 = vpack.c.b16 %v146, %v145
    %v149 = vshrl.u32 %v147, 16
    %v151 = vshll.u32 %v147, 16
    %v153 = vrot.slane %v151, 1
    %v154 = vor.u32 %v149, %v153
    %v156 = vld [vmem:[#allocation2 + $0x18] sm:$0xff]
    %v157 = vsel %vm99, %v154, %v156
    %158 = vst [vmem:[#allocation2 + $0x18] sm:$0xff] %v157
    %v159 = vld [vmem:[#allocation2 + $0x18] sm:$0x80]
    %v160 = vsel %vm105, 0, %v159
    %161 = vst [vmem:[#allocation2 + $0x18] sm:$0x80] %v160
    %v162 = vld [vmem:[#allocation2] sm:$0xff]
    %v163 = vld [vmem:[#allocation2 + $0x8] sm:$0xff]
    %v164 = vld [vmem:[#allocation2 + $0x10] sm:$0xff]
    %v165 = vld [vmem:[#allocation2 + $0x18] sm:$0xff]
    %v166 = vld [vmem:[#allocation6] sm:$0xf]
    %v167 = vld [vmem:[#allocation6 + $0x4] sm:$0xf]
    %v168 = vld [vmem:[#allocation6 + $0x8] sm:$0xf]
    %v169 = vld [vmem:[#allocation6 + $0xc] sm:$0xf]
    %v170 = vld [vmem:[#allocation6 + $0x10] sm:$0xf]
    %v171 = vld [vmem:[#allocation6 + $0x14] sm:$0xf]
    %v172 = vld [vmem:[#allocation6 + $0x18] sm:$0xf]
    %v173 = vld [vmem:[#allocation6 + $0x1c] sm:$0xf]
    %v174 = vld [vmem:[#allocation6 + $0x20] sm:$0xf]
    %v175 = vld [vmem:[#allocation6 + $0x24] sm:$0xf]
    %v176 = vld [vmem:[#allocation6 + $0x28] sm:$0xf]
    %v177 = vld [vmem:[#allocation6 + $0x2c] sm:$0xf]
    %v178 = vld [vmem:[#allocation6 + $0x30] sm:$0xf]
    %v179 = vld [vmem:[#allocation6 + $0x34] sm:$0xf]
    %v180 = vld [vmem:[#allocation6 + $0x38] sm:$0xf]
    %v181 = vld [vmem:[#allocation6 + $0x3c] sm:$0xf]
    %v182 = vld [vmem:[#allocation6 + $0x40] sm:$0xf]
    %v183 = vld [vmem:[#allocation6 + $0x44] sm:$0xf]
    %v184 = vld [vmem:[#allocation6 + $0x48] sm:$0xf]
    %v185 = vld [vmem:[#allocation6 + $0x4c] sm:$0xf]
    %v186 = vld [vmem:[#allocation6 + $0x50] sm:$0xf]
    %v187 = vld [vmem:[#allocation6 + $0x54] sm:$0xf]
    %v188 = vld [vmem:[#allocation6 + $0x58] sm:$0xf]
    %v189 = vld [vmem:[#allocation6 + $0x5c] sm:$0xf]
    %v190 = vld [vmem:[%s2] sm:$0x1]
    %v192 = vlaneseq
    %v193 = vshrl.u32 %v192, 7
    %v194 = vsub.s32 0, %v193
    %v195 = vrot.slane %v190, %v194
    %v221 = vunpack.c.l.b16 %v166
    %v222 = vunpack.c.l.b16 %v167
    %v223 = vunpack.c.l.b16 %v168
    %v224 = vunpack.c.l.b16 %v169
    %v225 = vunpack.c.l.b16 %v170
    %v226 = vunpack.c.l.b16 %v171
    %v227 = vunpack.c.l.b16 %v172
    %v228 = vunpack.c.l.b16 %v173
    %v229 = vunpack.c.l.b16 %v174
    %v230 = vunpack.c.l.b16 %v175
    %v231 = vunpack.c.l.b16 %v176
    %v232 = vunpack.c.l.b16 %v177
    %v233 = vunpack.c.l.b16 %v178
    %v234 = vunpack.c.l.b16 %v179
    %v235 = vunpack.c.l.b16 %v180
    %v236 = vunpack.c.l.b16 %v181
    %v237 = vunpack.c.l.b16 %v182
    %v238 = vunpack.c.l.b16 %v183
    %v239 = vunpack.c.l.b16 %v184
    %v240 = vunpack.c.l.b16 %v185
    %v241 = vunpack.c.l.b16 %v186
    %v242 = vunpack.c.l.b16 %v187
    %v243 = vunpack.c.l.b16 %v188
    %v244 = vunpack.c.l.b16 %v189
    %v245 = vpack.c.b16 %v222, %v221
    %v246 = vpack.c.b16 %v224, %v223
    %v247 = vpack.c.b16 %v226, %v225
    %v248 = vpack.c.b16 %v228, %v227
    %v249 = vpack.c.b16 %v230, %v229
    %v250 = vpack.c.b16 %v232, %v231
    %v251 = vpack.c.b16 %v234, %v233
    %v252 = vpack.c.b16 %v236, %v235
    %v253 = vpack.c.b16 %v238, %v237
    %v254 = vpack.c.b16 %v240, %v239
    %v255 = vpack.c.b16 %v242, %v241
    %v256 = vpack.c.b16 %v244, %v243
    %vm269 = vcmask 523264
    %v271 = vsel %vm269, %v163, 0
    %v274 = vsel %vm269, %v165, 0
    %276 = vmatprep.subr.bf16.mxu0 0
    %277 = vmatpush1.bf16.msra.mxu0 %v245
    %278 = vmatprep.subr.bf16.mxu0 0
    %279 = vmatpush1.bf16.msra.mxu0 %v246
    %280 = vmatprep.subr.bf16.mxu0 0
    %281 = vmatpush1.bf16.msra.mxu0 %v247
    %282 = vmatprep.subr.bf16.mxu0 0
    %283 = vmatpush1.bf16.msra.mxu0 %v248
    %284 = vmatprep.subr.bf16.mxu0 0
    %285 = vmatpush1.bf16.msra.mxu0 %v249
    %286 = vmatprep.subr.bf16.mxu0 0
    %287 = vmatpush1.bf16.msra.mxu0 %v250
    %288 = vmatprep.subr.bf16.mxu0 0
    %289 = vmatpush1.bf16.msra.mxu0 %v251
    %290 = vmatprep.subr.bf16.mxu0 0
    %291 = vmatpush1.bf16.msra.mxu0 %v252
    %292 = vmatprep.subr.bf16.mxu0 0
    %293 = vmatpush1.bf16.msra.mxu0 %v253
    %294 = vmatprep.subr.bf16.mxu0 0
    %295 = vmatpush1.bf16.msra.mxu0 %v254
    %296 = vmatprep.subr.bf16.mxu0 0
    %297 = vmatpush1.bf16.msra.mxu0 %v255
    %298 = vmatprep.subr.bf16.mxu0 0
    %299 = vmatpush1.bf16.msra.mxu0 %v256
    %300 = vmatprep.subr.bf16.mxu0 0
    %301 = vmatpush1.bf16.msra.mxu0 0
    %302 = vmatprep.subr.bf16.mxu0 0
    %303 = vmatpush1.bf16.msra.mxu0 0
    %304 = vmatprep.subr.bf16.mxu0 0
    %305 = vmatpush1.bf16.msra.mxu0 0
    %306 = vmatprep.subr.bf16.mxu0 0
    %307 = vmatpush1.bf16.msra.mxu0 0
    %308 = vmatprep.mubr.bf16.mxu0 %v271
    %309 = vmatmul.mubr.bf16.gmra.mrb[0].mxu0 %v162
    %v310 = vpop.f32.mrb[0].mxu0
    %v311 = vadd.f32 %v195, %v310
    %v312 = vpop.f32.mrb[0].mxu0
    %v313 = vpop.f32.mrb[0].mxu0
    %v314 = vadd.f32 %v195, %v313
    %v315 = vpop.f32.mrb[0].mxu0
    %316 = vmatprep.mubr.bf16.mxu0 %v274
    %317 = vmatmul.mubr.bf16.gmra.mrb[0].mxu0 %v164
    %v318 = vpop.f32.mrb[0].mxu0
    %v319 = vadd.f32 %v195, %v318
    %v320 = vpop.f32.mrb[0].mxu0
    %v321 = vpop.f32.mrb[0].mxu0
    %v322 = vadd.f32 %v195, %v321
    %v323 = vpop.f32.mrb[0].mxu0
    %324 = vdwg.mxu0
    %v325 = vmax.f32 %v311, 0.0
    %v326 = vmax.f32 %v314, 0.0
    %v327 = vmax.f32 %v319, 0.0
    %v328 = vmax.f32 %v322, 0.0
    %v329 = vpack.c.bf16 %v326, %v325
    %v330 = vpack.c.bf16 %v328, %v327
    %v333 = vunpack.c.l.b16 %v329
    %v334 = vunpack.c.h.b16 %v329
    %v335 = vunpack.c.l.b16 %v330
    %v336 = vunpack.c.h.b16 %v330
    %v337 = vpack.c.b16 %v333, %v333
    %v338 = vpack.c.b16 %v334, %v334
    %v339 = vpack.c.b16 %v335, %v335
    %v340 = vpack.c.b16 %v336, %v336
    %345 = vst [vmem:[#allocation8] sm:$0xf] %v337
    %346 = vst [vmem:[#allocation8 + $0x4] sm:$0xf] %v338
    %347 = vst [vmem:[#allocation8 + $0x8] sm:$0xf] %v339
    %348 = vst [vmem:[#allocation8 + $0xc] sm:$0xf] %v340
    // Predicated region
    $region22: #{tpu_custom_call.1} parent=1 // pred_check
      _
    $region23: #{tpu_custom_call.1} parent=1 // pred_check_branch
      %350 = sbr.rel (0) target = $region25
    $region24: #{tpu_custom_call.1} parent=1 // pred_region
      %s352 = ssub.s32 256, 256
      %353 = vsyncadd [#allocation5], %s352
      %s354 = sshll.u32 [#allocation8], 4
      %s355 = int_to_ptr.vmem [resolvable:$true] %s354
      %360 = dma.vmem_to_hbm [thread:$0]  %s355, 256, %s3, [#allocation5], 64, 64, 4
    $region25: #{tpu_custom_call.1} parent=1 // pred_fallthru
      _
    // Predicated region
    $region26: #{tpu_custom_call.1} parent=1 // pred_check
      _
    $region27: #{tpu_custom_call.1} parent=1 // pred_check_branch
      %362 = sbr.rel (0) target = $region29
    $region28: #{tpu_custom_call.1} parent=1 // pred_region
      %363 = dma.done [#allocation5], 256
    $region29: #{tpu_custom_call.1} parent=1 // pred_fallthru
      _
    %364 = vsyncpa [#allocation4], 1
    %365 = vsyncpa [#allocation7], 1
    %366 = vsyncpa [#allocation5], 1

</llo_original>
